<compile_context>
chip_gen: v7x
topology: tpu7x:2x2x1
jax: 0.10.0
libtpu: 0.0.40
codegen_flags: <defaults>
</compile_context>

<pallas_src>
import jax
import jax.numpy as jnp
from jax.experimental import pallas as pl
from jax.experimental.pallas import tpu as pltpu

LN_EPS = 1e-5


def _round_up(x, m):
    return (x + m - 1) // m * m


def _vmem_capacity_bytes():
    try:
        return int(pltpu.get_tpu_info().vmem_capacity_bytes)
    except Exception:
        return 64 * 1024 * 1024  # conservative default (v7x per-core VMEM)


def _make_ffn_kernel(mm_dtype):
    """Build the fused FFN kernel. mm_dtype: optional dtype for MXU operands (None = native)."""

    def kernel(x_ref, wa_ref, wg_ref, wd_ref, gamma_ref, beta_ref,
               o_ref, xn_ref, acc_ref):
        j = pl.program_id(1)

        # ---- init (first hidden tile): LayerNorm once per row tile, zero accumulator ----
        @pl.when(j == 0)
        def _():
            x = x_ref[...].astype(jnp.float32)
            mean = jnp.mean(x, axis=-1, keepdims=True)
            var = jnp.mean(jnp.square(x - mean), axis=-1, keepdims=True)
            xn = (x - mean) * jax.lax.rsqrt(var + LN_EPS)
            xn = xn * gamma_ref[...].astype(jnp.float32) + beta_ref[...].astype(jnp.float32)
            xn_ref[...] = xn.astype(xn_ref.dtype)
            acc_ref[...] = jnp.zeros_like(acc_ref)

        # ---- per hidden tile: a = xn@Wa, g = xn@Wg, acc += (a * silu(g)) @ Wdown ----
        xn = xn_ref[...]
        wa = wa_ref[...]
        wg = wg_ref[...]
        wd = wd_ref[...]
        if mm_dtype is not None:
            wa = wa.astype(mm_dtype)
            wg = wg.astype(mm_dtype)
            wd = wd.astype(mm_dtype)
        a = jnp.dot(xn, wa, preferred_element_type=jnp.float32)
        g = jnp.dot(xn, wg, preferred_element_type=jnp.float32)
        act = a * (g * jax.nn.sigmoid(g))                       # SwiGLU (f32 elementwise)
        acc_ref[...] += jnp.dot(act.astype(wd.dtype), wd,
                                preferred_element_type=jnp.float32)

        # ---- finalize (last hidden tile): residual add and store ----
        @pl.when(j == pl.num_programs(1) - 1)
        def _():
            o_ref[...] = (acc_ref[...] + x_ref[...].astype(jnp.float32)).astype(o_ref.dtype)

    return kernel


def feed_forward_pallas(x, w_up, w_down, gamma, beta, *,
                        tile_m=None, tile_h=256, matmul_dtype=None):
    """Fused FeedForward forward pass.

    x:      (B, T, D)
    w_up:   (D, 2H)  == up.weight.T  (value half first, gate half second; matches chunk(2, -1))
    w_down: (H, D)   == down.weight.T
    gamma, beta: (D,) LayerNorm affine parameters.
    """
    B, T, D = x.shape
    H = w_up.shape[1] // 2
    M = B * T

    cap = _vmem_capacity_bytes()
    vmem_limit = max(32 * 1024 * 1024, min(cap - 8 * 1024 * 1024, 120 * 1024 * 1024))

    # ---- hidden-dim tile --------------------------------------------------
    if H % 128 == 0:
        th = max(128, (min(tile_h, H) // 128) * 128)
        while H % th:
            th -= 128
        aligned = True
    else:
        th = H                       # single full-H block (toy / unaligned shapes only)
        aligned = False

    # ---- row tile ----------------------------------------------------------
    m8 = _round_up(max(M, 1), 8)
    if tile_m is None:
        tile_m = 1024 if cap >= 96 * 1024 * 1024 else 512   # v5e/v6e vs v7x (64 MiB VMEM)
    tm = min(_round_up(tile_m, 8), m8)
    # Ensure >=2 row tiles when M is large so v7x's second TensorCore gets work.
    if tm >= m8 and m8 >= 1024:
        tm = _round_up((m8 + 1) // 2, 8)

    # ---- shrink the row tile until the VMEM footprint fits the scoped limit ----
    xb = jnp.dtype(x.dtype).itemsize
    wb = jnp.dtype(w_up.dtype).itemsize
    xnb = jnp.dtype(matmul_dtype).itemsize if matmul_dtype is not None else xb

    def footprint(tm_, th_):
        act_bytes = tm_ * D * (2 * xb + 2 * xb + xnb + 4)   # x(2 buf) + out(2 buf) + xn + f32 acc
        w_bytes = 2 * 3 * D * th_ * wb                      # Wa / Wg / Wdown tiles, double-buffered
        return act_bytes + w_bytes + 4 * D * 4              # + gamma/beta

    while tm > 64 and footprint(tm, th) > vmem_limit - 4 * 1024 * 1024:
        tm = max(64, _round_up(tm // 2, 8))

    # ---- pad M only (activation data; zero rows are inert and sliced off) ----
    M_pad = _round_up(M, tm)
    x2 = x.reshape(M, D)
    if M_pad != M:
        x2 = jnp.pad(x2, ((0, M_pad - M), (0, 0)))

    gamma2 = gamma.reshape(1, D)
    beta2 = beta.reshape(1, D)

    n_h_blocks = H // th
    grid = (M_pad // tm, n_h_blocks)

    if aligned:
        # Address both halves of the *unsplit* w_up via BlockSpecs -> no weight copies.
        wa_arg = w_up
        wg_arg = w_up
        gate_off = n_h_blocks
        wa_spec = pl.BlockSpec((D, th), lambda i, j: (0, j))
        wg_spec = pl.BlockSpec((D, th), lambda i, j: (0, j + gate_off))
    else:
        # Toy / unaligned H: materialize the two halves (tiny weights, full-dim blocks).
        wa_arg = w_up[:, :H]
        wg_arg = w_up[:, H:]
        wa_spec = pl.BlockSpec((D, th), lambda i, j: (0, j))
        wg_spec = pl.BlockSpec((D, th), lambda i, j: (0, j))

    kernel = _make_ffn_kernel(matmul_dtype)
    xn_dtype = matmul_dtype if matmul_dtype is not None else x.dtype

    out = pl.pallas_call(
        kernel,
        out_shape=jax.ShapeDtypeStruct((M_pad, D), x.dtype),
        grid_spec=pltpu.PrefetchScalarGridSpec(
            num_scalar_prefetch=0,
            grid=grid,
            in_specs=[
                pl.BlockSpec((tm, D), lambda i, j: (i, 0)),   # x row tile (resident over j)
                wa_spec,                                      # W_up value half, hidden tile
                wg_spec,                                      # W_up gate half, hidden tile
                pl.BlockSpec((th, D), lambda i, j: (j, 0)),   # W_down hidden tile
                pl.BlockSpec((1, D), lambda i, j: (0, 0)),    # LN gamma
                pl.BlockSpec((1, D), lambda i, j: (0, 0)),    # LN beta
            ],
            out_specs=pl.BlockSpec((tm, D), lambda i, j: (i, 0)),
            scratch_shapes=[
                pltpu.VMEM((tm, D), xn_dtype),      # cached LayerNorm output
                pltpu.VMEM((tm, D), jnp.float32),   # f32 accumulator for the down-projection
            ],
        ),
        compiler_params=pltpu.CompilerParams(
            dimension_semantics=("parallel", "arbitrary"),
            vmem_limit_bytes=vmem_limit,
        ),
    )(x2, wa_arg, wg_arg, w_down, gamma2, beta2)

    return out[:M].reshape(B, T, D)


def feed_forward_ref(x, w_up, w_down, gamma, beta):
    """Pure-JAX f32 reference mirroring the PyTorch module (eval mode)."""
    xf = x.astype(jnp.float32)
    mean = jnp.mean(xf, axis=-1, keepdims=True)
    var = jnp.mean((xf - mean) ** 2, axis=-1, keepdims=True)
    xn = (xf - mean) * jax.lax.rsqrt(var + LN_EPS) * gamma.astype(jnp.float32) \
         + beta.astype(jnp.float32)
    up = xn @ w_up.astype(jnp.float32)
    h = up.shape[-1] // 2
    a, gate = up[..., :h], up[..., h:]
    act = a * (gate * jax.nn.sigmoid(gate))
    down = act @ w_down.astype(jnp.float32)
    return down + xf


if __name__ == "__main__":
    key = jax.random.PRNGKey(0)
    kx, kup, kdn, kx2, kup2, kdn2 = jax.random.split(key, 6)

    # ---- Tests 1-2: the module's toy shapes (dim=32, hidden=64), f32 ----
    B, T, D, H = 2, 8, 32, 64
    x = jax.random.normal(kx, (B, T, D), dtype=jnp.float32)
    gamma = jnp.ones((D,), jnp.float32)          # nn.LayerNorm defaults
    beta = jnp.zeros((D,), jnp.float32)
    w_up = jax.random.normal(kup, (D, 2 * H), jnp.float32) / jnp.sqrt(D)
    w_down0 = jnp.zeros((H, D), jnp.float32)     # zero_init(down) -> output == skip

    out = jax.block_until_ready(feed_forward_pallas(x, w_up, w_down0, gamma, beta))
    assert out.shape == (B, T, D)
    assert jnp.allclose(out, x, atol=1e-5, rtol=1e-5), "zero-init down: output must equal skip"

    w_down = jax.random.normal(kdn, (H, D), jnp.float32) / jnp.sqrt(H)
    out = jax.block_until_ready(feed_forward_pallas(x, w_up, w_down, gamma, beta))
    ref = feed_forward_ref(x, w_up, w_down, gamma, beta)
    assert jnp.allclose(out, ref.astype(out.dtype), atol=5e-2, rtol=5e-2), \
        "mismatch vs reference (f32, toy shapes)"

    # ---- Test 3: 128-aligned hidden dim -> BlockSpec-addressed unsplit w_up, 2 reduction steps ----
    D2, H2 = 64, 256
    x2 = jax.random.normal(kx2, (B, T, D2), jnp.float32)
    g2 = jnp.ones((D2,), jnp.float32)
    b2 = jnp.zeros((D2,), jnp.float32)
    w_up2 = jax.random.normal(kup2, (D2, 2 * H2), jnp.float32) / jnp.sqrt(D2)
    w_dn2 = jax.random.normal(kdn2, (H2, D2), jnp.float32) / jnp.sqrt(H2)
    out2 = jax.block_until_ready(
        feed_forward_pallas(x2, w_up2, w_dn2, g2, b2, tile_h=128))
    ref2 = feed_forward_ref(x2, w_up2, w_dn2, g2, b2)
    assert jnp.allclose(out2, ref2.astype(out2.dtype), atol=5e-2, rtol=5e-2), \
        "mismatch vs reference (f32, aligned H)"

    # ---- Test 4: bf16 production path (native MXU dtype) ----
    out3 = jax.block_until_ready(
        feed_forward_pallas(x2.astype(jnp.bfloat16), w_up2.astype(jnp.bfloat16),
                            w_dn2.astype(jnp.bfloat16), g2.astype(jnp.bfloat16),
                            b2.astype(jnp.bfloat16), tile_h=128,
                            matmul_dtype=jnp.bfloat16))
    assert jnp.allclose(out3.astype(jnp.float32), ref2, atol=2e-1, rtol=2e-1), \
        "mismatch vs reference (bf16)"

    print("KERNEL_OK")
</pallas_src>

<mosaic_0001>
module attributes {stable_mosaic.version = 11 : i64} {
  func.func @kernel(%arg0: i32, %arg1: i32, %arg2: memref<16x32xf32, #tpu.memory_space<vmem>>, %arg3: memref<32x64xf32, #tpu.memory_space<vmem>>, %arg4: memref<32x64xf32, #tpu.memory_space<vmem>>, %arg5: memref<64x32xf32, #tpu.memory_space<vmem>>, %arg6: memref<1x32xf32, #tpu.memory_space<vmem>>, %arg7: memref<1x32xf32, #tpu.memory_space<vmem>>, %arg8: memref<16x32xf32, #tpu.memory_space<vmem>>, %arg9: memref<16x32xf32, #tpu.memory_space<vmem>>, %arg10: memref<16x32xf32, #tpu.memory_space<vmem>>) attributes {dimension_semantics = [#tpu.dimension_semantics<parallel>, #tpu.dimension_semantics<arbitrary>], iteration_bounds = array<i64: 1, 1>, scalar_prefetch = 0 : i64, scratch_operands = 2 : i64, tpu.core_type = #tpu.core_type<tc>, window_params = [{transform_indices = @transform_0, window_bounds = array<i64: 16, 32>}, {transform_indices = @transform_1, window_bounds = array<i64: 32, 64>}, {transform_indices = @transform_2, window_bounds = array<i64: 32, 64>}, {transform_indices = @transform_3, window_bounds = array<i64: 64, 32>}, {pipeline_mode = #tpu.pipeline_mode<synchronous>, transform_indices = @transform_4, window_bounds = array<i64: 1, 32>}, {pipeline_mode = #tpu.pipeline_mode<synchronous>, transform_indices = @transform_5, window_bounds = array<i64: 1, 32>}, {transform_indices = @transform_6, window_bounds = array<i64: 16, 32>}]} {
    %c0_i32 = arith.constant 0 : i32
    %0 = arith.cmpi eq, %arg1, %c0_i32 : i32
    %1 = arith.extui %0 : i1 to i32
    %c0_i32_0 = arith.constant 0 : i32
    %2 = arith.cmpi ne, %1, %c0_i32_0 : i32
    scf.if %2 {
      %c0_17 = arith.constant 0 : index
      %c0_18 = arith.constant 0 : index
      %23 = vector.load %arg2[%c0_17, %c0_18] : memref<16x32xf32, #tpu.memory_space<vmem>>, vector<16x32xf32>
      %cst_19 = arith.constant dense<0.000000e+00> : vector<16xf32>
      %24 = vector.multi_reduction <add>, %23, %cst_19 [1] : vector<16x32xf32> to vector<16xf32>
      %25 = vector.shape_cast %24 : vector<16xf32> to vector<16x1xf32>
      %cst_20 = arith.constant 3.200000e+01 : f32
      %26 = vector.broadcast %cst_20 : f32 to vector<16x1xf32>
      %27 = arith.divf %25, %26 : vector<16x1xf32>
      %28 = vector.broadcast %27 : vector<16x1xf32> to vector<16x32xf32>
      %29 = arith.subf %23, %28 : vector<16x32xf32>
      %30 = arith.mulf %29, %29 : vector<16x32xf32>
      %cst_21 = arith.constant dense<0.000000e+00> : vector<16xf32>
      %31 = vector.multi_reduction <add>, %30, %cst_21 [1] : vector<16x32xf32> to vector<16xf32>
      %32 = vector.shape_cast %31 : vector<16xf32> to vector<16x1xf32>
      %cst_22 = arith.constant 3.200000e+01 : f32
      %33 = vector.broadcast %cst_22 : f32 to vector<16x1xf32>
      %34 = arith.divf %32, %33 : vector<16x1xf32>
      %35 = vector.broadcast %27 : vector<16x1xf32> to vector<16x32xf32>
      %36 = arith.subf %23, %35 : vector<16x32xf32>
      %cst_23 = arith.constant 9.99999974E-6 : f32
      %37 = vector.broadcast %cst_23 : f32 to vector<16x1xf32>
      %38 = arith.addf %34, %37 : vector<16x1xf32>
      %39 = math.rsqrt %38 : vector<16x1xf32>
      %40 = vector.broadcast %39 : vector<16x1xf32> to vector<16x32xf32>
      %41 = arith.mulf %36, %40 : vector<16x32xf32>
      %c0_24 = arith.constant 0 : index
      %c0_25 = arith.constant 0 : index
      %42 = vector.load %arg6[%c0_24, %c0_25] : memref<1x32xf32, #tpu.memory_space<vmem>>, vector<1x32xf32>
      %43 = vector.broadcast %42 : vector<1x32xf32> to vector<16x32xf32>
      %44 = arith.mulf %41, %43 : vector<16x32xf32>
      %c0_26 = arith.constant 0 : index
      %c0_27 = arith.constant 0 : index
      %45 = vector.load %arg7[%c0_26, %c0_27] : memref<1x32xf32, #tpu.memory_space<vmem>>, vector<1x32xf32>
      %46 = vector.broadcast %45 : vector<1x32xf32> to vector<16x32xf32>
      %47 = arith.addf %44, %46 : vector<16x32xf32>
      %c0_28 = arith.constant 0 : index
      %c0_29 = arith.constant 0 : index
      %48 = vector.load %arg9[%c0_28, %c0_29] : memref<16x32xf32, #tpu.memory_space<vmem>>, vector<16x32xf32>
      tpu.vector_store %arg9[%c0_28, %c0_29], %47 {strides = array<i32>} : memref<16x32xf32, #tpu.memory_space<vmem>>, vector<16x32xf32>,
      %cst_30 = arith.constant 0.000000e+00 : f32
      %49 = vector.broadcast %cst_30 : f32 to vector<16x32xf32>
      %c0_31 = arith.constant 0 : index
      %c0_32 = arith.constant 0 : index
      %50 = vector.load %arg10[%c0_31, %c0_32] : memref<16x32xf32, #tpu.memory_space<vmem>>, vector<16x32xf32>
      tpu.vector_store %arg10[%c0_31, %c0_32], %49 {strides = array<i32>} : memref<16x32xf32, #tpu.memory_space<vmem>>, vector<16x32xf32>,
    } else {
    }
    %c0 = arith.constant 0 : index
    %c0_1 = arith.constant 0 : index
    %3 = vector.load %arg9[%c0, %c0_1] : memref<16x32xf32, #tpu.memory_space<vmem>>, vector<16x32xf32>
    %c0_2 = arith.constant 0 : index
    %c0_3 = arith.constant 0 : index
    %4 = vector.load %arg3[%c0_2, %c0_3] : memref<32x64xf32, #tpu.memory_space<vmem>>, vector<32x64xf32>
    %c0_4 = arith.constant 0 : index
    %c0_5 = arith.constant 0 : index
    %5 = vector.load %arg4[%c0_4, %c0_5] : memref<32x64xf32, #tpu.memory_space<vmem>>, vector<32x64xf32>
    %c0_6 = arith.constant 0 : index
    %c0_7 = arith.constant 0 : index
    %6 = vector.load %arg5[%c0_6, %c0_7] : memref<64x32xf32, #tpu.memory_space<vmem>>, vector<64x32xf32>
    %cst = arith.constant dense<0.000000e+00> : vector<16x64xf32>
    %7 = tpu.matmul %3, %4, %cst {dimension_numbers = #tpu.dot_dimension_numbers<[1], [0], [0], [1], [0, 0, 1, 1], [], []>} : vector<16x32xf32>, vector<32x64xf32>, vector<16x64xf32> -> vector<16x64xf32>
    %cst_8 = arith.constant dense<0.000000e+00> : vector<16x64xf32>
    %8 = tpu.matmul %3, %5, %cst_8 {dimension_numbers = #tpu.dot_dimension_numbers<[1], [0], [0], [1], [0, 0, 1, 1], [], []>} : vector<16x32xf32>, vector<32x64xf32>, vector<16x64xf32> -> vector<16x64xf32>
    %9 = arith.negf %8 : vector<16x64xf32>
    %10 = math.exp %9 : vector<16x64xf32>
    %cst_9 = arith.constant 1.000000e+00 : f32
    %11 = vector.broadcast %cst_9 : f32 to vector<16x64xf32>
    %12 = arith.addf %11, %10 : vector<16x64xf32>
    %13 = arith.divf %11, %12 : vector<16x64xf32>
    %14 = arith.mulf %8, %13 : vector<16x64xf32>
    %15 = arith.mulf %7, %14 : vector<16x64xf32>
    %c0_10 = arith.constant 0 : index
    %c0_11 = arith.constant 0 : index
    %16 = vector.load %arg10[%c0_10, %c0_11] : memref<16x32xf32, #tpu.memory_space<vmem>>, vector<16x32xf32>
    %cst_12 = arith.constant dense<0.000000e+00> : vector<16x32xf32>
    %17 = tpu.matmul %15, %6, %cst_12 {dimension_numbers = #tpu.dot_dimension_numbers<[1], [0], [0], [1], [0, 0, 1, 1], [], []>} : vector<16x64xf32>, vector<64x32xf32>, vector<16x32xf32> -> vector<16x32xf32>
    %18 = arith.addf %16, %17 : vector<16x32xf32>
    %c0_13 = arith.constant 0 : index
    %c0_14 = arith.constant 0 : index
    %19 = vector.load %arg10[%c0_13, %c0_14] : memref<16x32xf32, #tpu.memory_space<vmem>>, vector<16x32xf32>
    tpu.vector_store %arg10[%c0_13, %c0_14], %18 {strides = array<i32>} : memref<16x32xf32, #tpu.memory_space<vmem>>, vector<16x32xf32>,
    %c0_i32_15 = arith.constant 0 : i32
    %20 = arith.cmpi eq, %arg1, %c0_i32_15 : i32
    %21 = arith.extui %20 : i1 to i32
    %c0_i32_16 = arith.constant 0 : i32
    %22 = arith.cmpi ne, %21, %c0_i32_16 : i32
    scf.if %22 {
      %c0_17 = arith.constant 0 : index
      %c0_18 = arith.constant 0 : index
      %23 = vector.load %arg10[%c0_17, %c0_18] : memref<16x32xf32, #tpu.memory_space<vmem>>, vector<16x32xf32>
      %c0_19 = arith.constant 0 : index
      %c0_20 = arith.constant 0 : index
      %24 = vector.load %arg2[%c0_19, %c0_20] : memref<16x32xf32, #tpu.memory_space<vmem>>, vector<16x32xf32>
      %25 = arith.addf %23, %24 : vector<16x32xf32>
      %c0_21 = arith.constant 0 : index
      %c0_22 = arith.constant 0 : index
      %26 = vector.load %arg8[%c0_21, %c0_22] : memref<16x32xf32, #tpu.memory_space<vmem>>, vector<16x32xf32>
      tpu.vector_store %arg8[%c0_21, %c0_22], %25 {strides = array<i32>} : memref<16x32xf32, #tpu.memory_space<vmem>>, vector<16x32xf32>,
    } else {
    }
    return
  }
  func.func @transform_0(%arg0: i32, %arg1: i32) -> (i32, i32) {
    %c0_i32 = arith.constant 0 : i32
    %c0_i32_0 = arith.constant 0 : i32
    return %arg0, %c0_i32 : i32, i32
  }
  func.func @transform_1(%arg0: i32, %arg1: i32) -> (i32, i32) {
    %c0_i32 = arith.constant 0 : i32
    %c0_i32_0 = arith.constant 0 : i32
    return %c0_i32, %arg1 : i32, i32
  }
  func.func @transform_2(%arg0: i32, %arg1: i32) -> (i32, i32) {
    %c0_i32 = arith.constant 0 : i32
    %c0_i32_0 = arith.constant 0 : i32
    return %c0_i32, %arg1 : i32, i32
  }
  func.func @transform_3(%arg0: i32, %arg1: i32) -> (i32, i32) {
    %c0_i32 = arith.constant 0 : i32
    %c0_i32_0 = arith.constant 0 : i32
    return %arg1, %c0_i32 : i32, i32
  }
  func.func @transform_4(%arg0: i32, %arg1: i32) -> (i32, i32) {
    %c0_i32 = arith.constant 0 : i32
    %c0_i32_0 = arith.constant 0 : i32
    %c0_i32_1 = arith.constant 0 : i32
    return %c0_i32, %c0_i32_0 : i32, i32
  }
  func.func @transform_5(%arg0: i32, %arg1: i32) -> (i32, i32) {
    %c0_i32 = arith.constant 0 : i32
    %c0_i32_0 = arith.constant 0 : i32
    %c0_i32_1 = arith.constant 0 : i32
    return %c0_i32, %c0_i32_0 : i32, i32
  }
  func.func @transform_6(%arg0: i32, %arg1: i32) -> (i32, i32) {
    %c0_i32 = arith.constant 0 : i32
    %c0_i32_0 = arith.constant 0 : i32
    return %arg0, %c0_i32 : i32, i32
  }
}

</mosaic_0001>

<llo_original>
// kernel: tpu_custom_call.1
$region0: #{tpu_custom_call.1}
  #allocation0 [shape = 'u32[]', space=smem, size = 0x4, offset = 0x4, fixed_abs, tag = 'smem constant byte address 0x4 - core index']
  #allocation1 [shape = 'u32[144,128]{1,0:T(1,128)}', space=vmem, size = 0x12000, scoped, tag = 'internal scratch']
  #allocation2 [shape = 'f32[16,32]{1,0:T(8,128)}', space=vmem, size = 0x2000, scoped, tag = 'scratch operand']
  #allocation3 [shape = 'f32[16,32]{1,0:T(8,128)}', space=vmem, size = 0x2000, scoped, tag = 'scratch operand']
  %s0 = inlined_call_operand.vmem [shape: f32[16,32], index: 0, kind: input, shape index: {}]
  %s1 = inlined_call_operand.vmem [shape: f32[32,64], index: 1, kind: input, shape index: {}]
  %s2 = inlined_call_operand.vmem [shape: f32[32,64], index: 2, kind: input, shape index: {}]
  %s3 = inlined_call_operand.vmem [shape: f32[64,32], index: 3, kind: input, shape index: {}]
  %s4 = inlined_call_operand.vmem [shape: f32[1,32], index: 4, kind: input, shape index: {}]
  %s5 = inlined_call_operand.vmem [shape: f32[1,32], index: 5, kind: input, shape index: {}]
  %s6 = inlined_call_operand.hbm [shape: f32[16,32], index: 6, kind: output, shape index: {}]
  %s7 = sld [smem:[#allocation0]]
  $region42: #{tpu_custom_call.1} parent=0
    _
  %s9 = ssub.s32 1, %s7
  %s10 = scalar_select 0, %s9, %s7
  $region1: #{tpu_custom_call.1} parent=0
    #allocation4 [shape = 'u8[8192]{0}', space=vmem, size = 0x2000, scoped, tag = 'output window, operand 0, single buffered']
    #allocation5 [shape = 's32[1]{0}', space=sflag, size = 0x4, scoped, tag = 'scoped memory for tpu_custom_call.1']
    %11 = vsyncpa [#allocation5], 0
    // Predicated region
    $region2: #{tpu_custom_call.1} parent=1 // pred_check
      _
    $region3: #{tpu_custom_call.1} parent=1 // pred_check_branch
      %13 = sbr.rel (0) target = $region5
    $region4: #{tpu_custom_call.1} parent=1 // pred_region
      _
    $region5: #{tpu_custom_call.1} parent=1 // pred_fallthru
      _
    // Predicated region
    $region6: #{tpu_custom_call.1} parent=1 // pred_check
      _
    $region7: #{tpu_custom_call.1} parent=1 // pred_check_branch
      %15 = sbr.rel (0) target = $region9
    $region8: #{tpu_custom_call.1} parent=1 // pred_region
      _
    $region9: #{tpu_custom_call.1} parent=1 // pred_fallthru
      _
    // Predicated region
    $region10: #{tpu_custom_call.1} parent=1 // pred_check
      _
    $region11: #{tpu_custom_call.1} parent=1 // pred_check_branch
      %17 = sbr.rel (0) target = $region13
    $region12: #{tpu_custom_call.1} parent=1 // pred_region
      _
    $region13: #{tpu_custom_call.1} parent=1 // pred_fallthru
      _
    // Predicated region
    $region14: #{tpu_custom_call.1} parent=1 // pred_check
      _
    $region15: #{tpu_custom_call.1} parent=1 // pred_check_branch
      %19 = sbr.rel (0) target = $region17
    $region16: #{tpu_custom_call.1} parent=1 // pred_region
      _
    $region17: #{tpu_custom_call.1} parent=1 // pred_fallthru
      _
    // Predicated region
    $region18: #{tpu_custom_call.1} parent=1 // pred_check
      _
    $region19: #{tpu_custom_call.1} parent=1 // pred_check_branch
      %21 = sbr.rel (0) target = $region21
    $region20: #{tpu_custom_call.1} parent=1 // pred_region
      _
    $region21: #{tpu_custom_call.1} parent=1 // pred_fallthru
      _
    // Predicated region
    $region22: #{tpu_custom_call.1} parent=1 // pred_check
      _
    $region23: #{tpu_custom_call.1} parent=1 // pred_check_branch
      %23 = sbr.rel (0) target = $region25
    $region24: #{tpu_custom_call.1} parent=1 // pred_region
      _
    $region25: #{tpu_custom_call.1} parent=1 // pred_fallthru
      _
    %p24 = scmp.eq.s32.totalorder 0, 0
    // Predicated region
    $region26: #{tpu_custom_call.1} parent=1 // pred_check
      %p25 = pneg %p24
    $region27: #{tpu_custom_call.1} parent=1 // pred_check_branch
      %27 = sbr.rel (%p25) target = $region29
    $region28: #{tpu_custom_call.1} parent=1 // pred_region
      %v28 = vld [vmem:[%s0] sm:$0xff]
      %v29 = vld [vmem:[%s0 + $0x8] sm:$0xff]
      %vm30 = vcmask 261120
      %v31 = vsel %vm30, %v28, 0.0
      %32 = vadd.xlane.f32.xlu0 %v31
      %v33 = vpop.xlane.xlu0 %32
      %v34 = vsel %vm30, %v29, 0.0
      %35 = vadd.xlane.f32.xlu0 %v34
      %v36 = vpop.xlane.xlu0 %35
      %v37 = vrcp.pop 32.0
      %v38 = vmul.f32 %v33, %v37
      %v39 = vmul.f32 %v36, %v37
      %v40 = vsub.f32 %v28, %v38
      %v41 = vsub.f32 %v29, %v39
      %v42 = vmul.f32 %v40, %v40
      %v43 = vmul.f32 %v41, %v41
      %v44 = vsel %vm30, %v42, 0.0
      %45 = vadd.xlane.f32.xlu0 %v44
      %v46 = vpop.xlane.xlu0 %45
      %v47 = vsel %vm30, %v43, 0.0
      %48 = vadd.xlane.f32.xlu0 %v47
      %v49 = vpop.xlane.xlu0 %48
      %v50 = vmul.f32 %v46, %v37
      %v51 = vmul.f32 %v49, %v37
      %v52 = vadd.f32 %v50, 1e-05
      %v53 = vadd.f32 %v51, 1e-05
      %v54 = vrsqrt.pop %v52
      %v55 = vrsqrt.pop %v53
      %v56 = vmul.f32 %v40, %v54
      %v57 = vmul.f32 %v41, %v55
      %v58 = vld [vmem:[%s4] sm:$0x1]
      %v60 = vlaneseq
      %v61 = vshrl.u32 %v60, 7
      %v62 = vsub.s32 0, %v61
      %v63 = vrot.slane %v58, %v62
      %v65 = vmul.f32 %v56, %v63
      %v66 = vmul.f32 %v57, %v63
      %v67 = vld [vmem:[%s5] sm:$0x1]
      %v69 = vlaneseq
      %v70 = vshrl.u32 %v69, 7
      %v71 = vsub.s32 0, %v70
      %v72 = vrot.slane %v67, %v71
      %v74 = vadd.f32 %v65, %v72
      %v75 = vadd.f32 %v66, %v72
      %76 = vst.msk [vmem:[#allocation2] sm:$0xff] %vm30, %v74
      %77 = vst.msk [vmem:[#allocation2 + $0x8] sm:$0xff] %vm30, %v75
      %78 = vst.msk [vmem:[#allocation3] sm:$0xff] %vm30, 0.0
      %79 = vst.msk [vmem:[#allocation3 + $0x8] sm:$0xff] %vm30, 0.0
    $region29: #{tpu_custom_call.1} parent=1 // pred_fallthru
      _
    %v80 = vld [vmem:[#allocation2] sm:$0xff]
    %v81 = vld [vmem:[#allocation2 + $0x8] sm:$0xff]
    %v82 = vld [vmem:[%s1] sm:$0xff]
    %v83 = vld [vmem:[%s1 + $0x8] sm:$0xff]
    %v84 = vld [vmem:[%s1 + $0x10] sm:$0xff]
    %v85 = vld [vmem:[%s1 + $0x18] sm:$0xff]
    %v86 = vld [vmem:[%s2] sm:$0xff]
    %v87 = vld [vmem:[%s2 + $0x8] sm:$0xff]
    %v88 = vld [vmem:[%s2 + $0x10] sm:$0xff]
    %v89 = vld [vmem:[%s2 + $0x18] sm:$0xff]
    %v90 = vld [vmem:[%s3] sm:$0xff]
    %v91 = vld [vmem:[%s3 + $0x8] sm:$0xff]
    %v92 = vld [vmem:[%s3 + $0x10] sm:$0xff]
    %v93 = vld [vmem:[%s3 + $0x18] sm:$0xff]
    %v94 = vld [vmem:[%s3 + $0x20] sm:$0xff]
    %v95 = vld [vmem:[%s3 + $0x28] sm:$0xff]
    %v96 = vld [vmem:[%s3 + $0x30] sm:$0xff]
    %v97 = vld [vmem:[%s3 + $0x38] sm:$0xff]
    %vm98 = vcmask 261120
    %v100 = vsel %vm98, %v80, 0
    %v103 = vsel %vm98, %v81, 0
    %105 = vmatprep.subr.mxu0 0.0
    %106 = vmatpush1.msra.mxu0 %v82
    %107 = vmatprep.subr.mxu0 0.0
    %108 = vmatpush1.msra.mxu0 %v83
    %109 = vmatprep.subr.mxu0 0.0
    %110 = vmatpush1.msra.mxu0 %v84
    %111 = vmatprep.subr.mxu0 0.0
    %112 = vmatpush1.msra.mxu0 %v85
    %113 = vmatprep.subr.mxu0 0.0
    %114 = vmatpush1.msra.mxu0 0.0
    %115 = vmatprep.subr.mxu0 0.0
    %116 = vmatpush1.msra.mxu0 0.0
    %117 = vmatprep.subr.mxu0 0.0
    %118 = vmatpush1.msra.mxu0 0.0
    %119 = vmatprep.subr.mxu0 0.0
    %120 = vmatpush1.msra.mxu0 0.0
    %121 = vmatprep.subr.mxu0 0.0
    %122 = vmatpush1.msra.mxu0 0.0
    %123 = vmatprep.subr.mxu0 0.0
    %124 = vmatpush1.msra.mxu0 0.0
    %125 = vmatprep.subr.mxu0 0.0
    %126 = vmatpush1.msra.mxu0 0.0
    %127 = vmatprep.subr.mxu0 0.0
    %128 = vmatpush1.msra.mxu0 0.0
    %129 = vmatprep.subr.mxu0 0.0
    %130 = vmatpush1.msra.mxu0 0.0
    %131 = vmatprep.subr.mxu0 0.0
    %132 = vmatpush1.msra.mxu0 0.0
    %133 = vmatprep.subr.mxu0 0.0
    %134 = vmatpush1.msra.mxu0 0.0
    %135 = vmatprep.subr.mxu0 0.0
    %136 = vmatpush1.msra.mxu0 0.0
    %137 = vmatprep.subr.mxu0 0.0
    %138 = vmatpush1.msra.mxu0 0.0
    %139 = vmatprep.subr.mxu0 0.0
    %140 = vmatpush1.msra.mxu0 0.0
    %141 = vmatprep.subr.mxu0 0.0
    %142 = vmatpush1.msra.mxu0 0.0
    %143 = vmatprep.subr.mxu0 0.0
    %144 = vmatpush1.msra.mxu0 0.0
    %145 = vmatprep.subr.mxu0 0.0
    %146 = vmatpush1.msra.mxu0 0.0
    %147 = vmatprep.subr.mxu0 0.0
    %148 = vmatpush1.msra.mxu0 0.0
    %149 = vmatprep.subr.mxu0 0.0
    %150 = vmatpush1.msra.mxu0 0.0
    %151 = vmatprep.subr.mxu0 0.0
    %152 = vmatpush1.msra.mxu0 0.0
    %153 = vmatprep.subr.mxu0 0.0
    %154 = vmatpush1.msra.mxu0 0.0
    %155 = vmatprep.subr.mxu0 0.0
    %156 = vmatpush1.msra.mxu0 0.0
    %157 = vmatprep.subr.mxu0 0.0
    %158 = vmatpush1.msra.mxu0 0.0
    %159 = vmatprep.subr.mxu0 0.0
    %160 = vmatpush1.msra.mxu0 0.0
    %161 = vmatprep.subr.mxu0 0.0
    %162 = vmatpush1.msra.mxu0 0.0
    %163 = vmatprep.subr.mxu0 0.0
    %164 = vmatpush1.msra.mxu0 0.0
    %165 = vmatprep.subr.mxu0 0.0
    %166 = vmatpush1.msra.mxu0 0.0
    %167 = vmatprep.subr.mxu0 0.0
    %168 = vmatpush1.msra.mxu0 0.0
    %169 = vmatprep.mubr.f32.mxu0 0.0
    %170 = vmatmul.mubr.f32.gmra.mrb[0].mxu0 %v100
    %v171 = vpop.f32.mrb[0].mxu0
    %v172 = vadd.f32 0.0, %v171
    %v173 = vpop.f32.mrb[0].mxu0
    %174 = vmatprep.mubr.f32.mxu0 0.0
    %175 = vmatmul.mubr.f32.gmra.mrb[0].mxu0 %v103
    %v176 = vpop.f32.mrb[0].mxu0
    %v177 = vadd.f32 0.0, %v176
    %v178 = vpop.f32.mrb[0].mxu0
    %179 = vdwg.mxu0
    %180 = vmatprep.subr.mxu0 0.0
    %181 = vmatpush1.msra.mxu0 %v86
    %182 = vmatprep.subr.mxu0 0.0
    %183 = vmatpush1.msra.mxu0 %v87
    %184 = vmatprep.subr.mxu0 0.0
    %185 = vmatpush1.msra.mxu0 %v88
    %186 = vmatprep.subr.mxu0 0.0
    %187 = vmatpush1.msra.mxu0 %v89
    %188 = vmatprep.subr.mxu0 0.0
    %189 = vmatpush1.msra.mxu0 0.0
    %190 = vmatprep.subr.mxu0 0.0
    %191 = vmatpush1.msra.mxu0 0.0
    %192 = vmatprep.subr.mxu0 0.0
    %193 = vmatpush1.msra.mxu0 0.0
    %194 = vmatprep.subr.mxu0 0.0
    %195 = vmatpush1.msra.mxu0 0.0
    %196 = vmatprep.subr.mxu0 0.0
    %197 = vmatpush1.msra.mxu0 0.0
    %198 = vmatprep.subr.mxu0 0.0
    %199 = vmatpush1.msra.mxu0 0.0
    %200 = vmatprep.subr.mxu0 0.0
    %201 = vmatpush1.msra.mxu0 0.0
    %202 = vmatprep.subr.mxu0 0.0
    %203 = vmatpush1.msra.mxu0 0.0
    %204 = vmatprep.subr.mxu0 0.0
    %205 = vmatpush1.msra.mxu0 0.0
    %206 = vmatprep.subr.mxu0 0.0
    %207 = vmatpush1.msra.mxu0 0.0
    %208 = vmatprep.subr.mxu0 0.0
    %209 = vmatpush1.msra.mxu0 0.0
    %210 = vmatprep.subr.mxu0 0.0
    %211 = vmatpush1.msra.mxu0 0.0
    %212 = vmatprep.subr.mxu0 0.0
    %213 = vmatpush1.msra.mxu0 0.0
    %214 = vmatprep.subr.mxu0 0.0
    %215 = vmatpush1.msra.mxu0 0.0
    %216 = vmatprep.subr.mxu0 0.0
    %217 = vmatpush1.msra.mxu0 0.0
    %218 = vmatprep.subr.mxu0 0.0
    %219 = vmatpush1.msra.mxu0 0.0
    %220 = vmatprep.subr.mxu0 0.0
    %221 = vmatpush1.msra.mxu0 0.0
    %222 = vmatprep.subr.mxu0 0.0
    %223 = vmatpush1.msra.mxu0 0.0
    %224 = vmatprep.subr.mxu0 0.0
    %225 = vmatpush1.msra.mxu0 0.0
    %226 = vmatprep.subr.mxu0 0.0
    %227 = vmatpush1.msra.mxu0 0.0
    %228 = vmatprep.subr.mxu0 0.0
    %229 = vmatpush1.msra.mxu0 0.0
    %230 = vmatprep.subr.mxu0 0.0
    %231 = vmatpush1.msra.mxu0 0.0
    %232 = vmatprep.subr.mxu0 0.0
    %233 = vmatpush1.msra.mxu0 0.0
    %234 = vmatprep.subr.mxu0 0.0
    %235 = vmatpush1.msra.mxu0 0.0
    %236 = vmatprep.subr.mxu0 0.0
    %237 = vmatpush1.msra.mxu0 0.0
    %238 = vmatprep.subr.mxu0 0.0
    %239 = vmatpush1.msra.mxu0 0.0
    %240 = vmatprep.subr.mxu0 0.0
    %241 = vmatpush1.msra.mxu0 0.0
    %242 = vmatprep.subr.mxu0 0.0
    %243 = vmatpush1.msra.mxu0 0.0
    %244 = vmatprep.mubr.f32.mxu0 0.0
    %245 = vmatmul.mubr.f32.gmra.mrb[0].mxu0 %v100
    %v246 = vpop.f32.mrb[0].mxu0
    %v247 = vadd.f32 0.0, %v246
    %v248 = vpop.f32.mrb[0].mxu0
    %249 = vmatprep.mubr.f32.mxu0 0.0
    %250 = vmatmul.mubr.f32.gmra.mrb[0].mxu0 %v103
    %v251 = vpop.f32.mrb[0].mxu0
    %v252 = vadd.f32 0.0, %v251
    %v253 = vpop.f32.mrb[0].mxu0
    %254 = vdwg.mxu0
    %v255 = vxor.u32 %v247, 2147483648
    %v256 = vxor.u32 %v252, 2147483648
    %v257 = vmul.f32 %v255, 1.442695
    %v258 = vpow.pop %v257
    %v259 = vmul.f32 %v256, 1.442695
    %v260 = vpow.pop %v259
    %v261 = vadd.f32 %v258, 1.0
    %v262 = vadd.f32 %v260, 1.0
    %v263 = vrcp.pop %v261
    %v264 = vmul.f32 1.0, %v263
    %v265 = vrcp.pop %v262
    %v266 = vmul.f32 1.0, %v265
    %v267 = vmul.f32 %v247, %v264
    %v268 = vmul.f32 %v252, %v266
    %v269 = vmul.f32 %v172, %v267
    %v270 = vmul.f32 %v177, %v268
    %v271 = vld [vmem:[#allocation3] sm:$0xff]
    %v272 = vld [vmem:[#allocation3 + $0x8] sm:$0xff]
    %vm273 = vcmask 523264
    %v275 = vsel %vm273, %v269, 0
    %v278 = vsel %vm273, %v270, 0
    %280 = vmatprep.subr.mxu0 0.0
    %281 = vmatpush1.msra.mxu0 %v90
    %282 = vmatprep.subr.mxu0 0.0
    %283 = vmatpush1.msra.mxu0 %v91
    %284 = vmatprep.subr.mxu0 0.0
    %285 = vmatpush1.msra.mxu0 %v92
    %286 = vmatprep.subr.mxu0 0.0
    %287 = vmatpush1.msra.mxu0 %v93
    %288 = vmatprep.subr.mxu0 0.0
    %289 = vmatpush1.msra.mxu0 %v94
    %290 = vmatprep.subr.mxu0 0.0
    %291 = vmatpush1.msra.mxu0 %v95
    %292 = vmatprep.subr.mxu0 0.0
    %293 = vmatpush1.msra.mxu0 %v96
    %294 = vmatprep.subr.mxu0 0.0
    %295 = vmatpush1.msra.mxu0 %v97
    %296 = vmatprep.subr.mxu0 0.0
    %297 = vmatpush1.msra.mxu0 0.0
    %298 = vmatprep.subr.mxu0 0.0
    %299 = vmatpush1.msra.mxu0 0.0
    %300 = vmatprep.subr.mxu0 0.0
    %301 = vmatpush1.msra.mxu0 0.0
    %302 = vmatprep.subr.mxu0 0.0
    %303 = vmatpush1.msra.mxu0 0.0
    %304 = vmatprep.subr.mxu0 0.0
    %305 = vmatpush1.msra.mxu0 0.0
    %306 = vmatprep.subr.mxu0 0.0
    %307 = vmatpush1.msra.mxu0 0.0
    %308 = vmatprep.subr.mxu0 0.0
    %309 = vmatpush1.msra.mxu0 0.0
    %310 = vmatprep.subr.mxu0 0.0
    %311 = vmatpush1.msra.mxu0 0.0
    %312 = vmatprep.subr.mxu0 0.0
    %313 = vmatpush1.msra.mxu0 0.0
    %314 = vmatprep.subr.mxu0 0.0
    %315 = vmatpush1.msra.mxu0 0.0
    %316 = vmatprep.subr.mxu0 0.0
    %317 = vmatpush1.msra.mxu0 0.0
    %318 = vmatprep.subr.mxu0 0.0
    %319 = vmatpush1.msra.mxu0 0.0
    %320 = vmatprep.subr.mxu0 0.0
    %321 = vmatpush1.msra.mxu0 0.0
    %322 = vmatprep.subr.mxu0 0.0
    %323 = vmatpush1.msra.mxu0 0.0
    %324 = vmatprep.subr.mxu0 0.0
    %325 = vmatpush1.msra.mxu0 0.0
    %326 = vmatprep.subr.mxu0 0.0
    %327 = vmatpush1.msra.mxu0 0.0
    %328 = vmatprep.subr.mxu0 0.0
    %329 = vmatpush1.msra.mxu0 0.0
    %330 = vmatprep.subr.mxu0 0.0
    %331 = vmatpush1.msra.mxu0 0.0
    %332 = vmatprep.subr.mxu0 0.0
    %333 = vmatpush1.msra.mxu0 0.0
    %334 = vmatprep.subr.mxu0 0.0
    %335 = vmatpush1.msra.mxu0 0.0
    %336 = vmatprep.subr.mxu0 0.0
    %337 = vmatpush1.msra.mxu0 0.0
    %338 = vmatprep.subr.mxu0 0.0
    %339 = vmatpush1.msra.mxu0 0.0
    %340 = vmatprep.subr.mxu0 0.0
    %341 = vmatpush1.msra.mxu0 0.0
    %342 = vmatprep.subr.mxu0 0.0
    %343 = vmatpush1.msra.mxu0 0.0
    %344 = vmatprep.mubr.f32.mxu0 0.0
    %345 = vmatmul.mubr.f32.gmra.mrb[0].mxu0 %v275
    %v346 = vpop.f32.mrb[0].mxu0
    %v347 = vadd.f32 0.0, %v346
    %v348 = vpop.f32.mrb[0].mxu0
    %349 = vmatprep.mubr.f32.mxu0 0.0
    %350 = vmatmul.mubr.f32.gmra.mrb[0].mxu0 %v278
    %v351 = vpop.f32.mrb[0].mxu0
    %v352 = vadd.f32 0.0, %v351
    %v353 = vpop.f32.mrb[0].mxu0
    %354 = vdwg.mxu0
    %v355 = vadd.f32 %v271, %v347
    %v356 = vadd.f32 %v272, %v352
    %357 = vst.msk [vmem:[#allocation3] sm:$0xff] %vm98, %v355
    %358 = vst.msk [vmem:[#allocation3 + $0x8] sm:$0xff] %vm98, %v356
    // Predicated region
    $region30: #{tpu_custom_call.1} parent=1 // pred_check
      %p359 = pneg %p24
    $region31: #{tpu_custom_call.1} parent=1 // pred_check_branch
      %361 = sbr.rel (%p359) target = $region33
    $region32: #{tpu_custom_call.1} parent=1 // pred_region
      %v362 = vld [vmem:[#allocation3] sm:$0xff]
      %v363 = vld [vmem:[#allocation3 + $0x8] sm:$0xff]
      %v364 = vld [vmem:[%s0] sm:$0xff]
      %v365 = vld [vmem:[%s0 + $0x8] sm:$0xff]
      %v366 = vadd.f32 %v362, %v364
      %v367 = vadd.f32 %v363, %v365
      %368 = vst.msk [vmem:[#allocation4] sm:$0xff] %vm98, %v366
      %369 = vst.msk [vmem:[#allocation4 + $0x8] sm:$0xff] %vm98, %v367
    $region33: #{tpu_custom_call.1} parent=1 // pred_fallthru
      _
    // Predicated region
    $region34: #{tpu_custom_call.1} parent=1 // pred_check
      _
    $region35: #{tpu_custom_call.1} parent=1 // pred_check_branch
      %371 = sbr.rel (0) target = $region37
    $region36: #{tpu_custom_call.1} parent=1 // pred_region
      %s373 = ssub.s32 256, 256
      %374 = vsyncadd [#allocation5], %s373
      %s375 = sshll.u32 [#allocation4], 4
      %s376 = int_to_ptr.vmem [resolvable:$true] %s375
      %381 = dma.vmem_to_hbm [thread:$0]  %s376, 256, %s6, [#allocation5], 128, 128, 8
    $region37: #{tpu_custom_call.1} parent=1 // pred_fallthru
      _
    // Predicated region
    $region38: #{tpu_custom_call.1} parent=1 // pred_check
      _
    $region39: #{tpu_custom_call.1} parent=1 // pred_check_branch
      %383 = sbr.rel (0) target = $region41
    $region40: #{tpu_custom_call.1} parent=1 // pred_region
      %384 = dma.done [#allocation5], 256
    $region41: #{tpu_custom_call.1} parent=1 // pred_fallthru
      _
    %385 = vsyncpa [#allocation5], 1

</llo_original>
